<compile_context>
chip_gen: v7x
topology: tpu7x:2x2x1
jax: 0.10.0
libtpu: 0.0.40
codegen_flags: <defaults>
</compile_context>

<pallas_src>
import functools

import jax
import jax.numpy as jnp
from jax.experimental import pallas as pl
from jax.experimental.pallas import tpu as pltpu


def _attention_kernel(x_ref, w1_ref, b1_ref, w2_ref, b2_ref, o_ref, acc_ref, *,
                      hw_total, tile_hw, needs_mask, inv_temp):
    # x_ref: (TB, C, TILE_HW)   (stream dtype)
    # w1_ref: (C, H1), b1_ref: (1, H1)
    # w2_ref: (H1, K), b2_ref: (1, K)
    # o_ref:  (TB, K)           float32
    # acc_ref: (TB, C)          float32 scratch (running spatial sum)
    hw_step = pl.program_id(1)
    last_hw = pl.num_programs(1) - 1

    @pl.when(hw_step == 0)
    def _init():
        acc_ref[...] = jnp.zeros_like(acc_ref)

    x = x_ref[...].astype(jnp.float32)
    if needs_mask:
        # Last HW block is partial: zero out the pad lanes so they do not
        # corrupt the spatial sum.
        lane = jax.lax.broadcasted_iota(jnp.int32, x.shape, dimension=2)
        valid = (hw_step * tile_hw + lane) < hw_total
        x = jnp.where(valid, x, 0.0)

    acc_ref[...] += jnp.sum(x, axis=-1)  # (TB, C) partial spatial sum

    @pl.when(hw_step == last_hw)
    def _finalize():
        # AdaptiveAvgPool2d(1) + Flatten: divide the accumulated sum by the
        # true spatial size exactly once.
        pooled = acc_ref[...] * (1.0 / float(hw_total))  # (TB, C)

        # fc1 + ReLU  (tiny matmul; MXU padding waste is irrelevant here).
        h = jnp.dot(pooled, w1_ref[...], preferred_element_type=jnp.float32)
        h = jnp.maximum(h + b1_ref[...], 0.0)

        # fc2
        logits = jnp.dot(h, w2_ref[...], preferred_element_type=jnp.float32)
        logits = logits + b2_ref[...]

        # softmax(logits / temp, dim=-1), numerically stable.
        scaled = logits * inv_temp
        m = jnp.max(scaled, axis=-1, keepdims=True)
        e = jnp.exp(scaled - m)
        o_ref[...] = e / jnp.sum(e, axis=-1, keepdims=True)


def attention_layer_forward(x, w1, b1, w2, b2, temperature=30.0, *,
                            max_tile_hw=512, stream_dtype=None):
    """x: (B, C, H, W). Returns softmax attention weights (B, K) in float32.

    stream_dtype: optionally cast the streamed activation (e.g. jnp.bfloat16)
    to halve HBM traffic; accumulation stays f32.
    """
    B, C, H, W = x.shape
    HW = H * W
    x3 = x.reshape(B, C, HW)
    if stream_dtype is not None:
        x3 = x3.astype(stream_dtype)

    C_in, H1 = w1.shape
    H1b, K = w2.shape
    assert C_in == C and H1b == H1

    # --- tile selection -----------------------------------------------------
    # Last (lane) dim of the x block must be a multiple of 128 or the full HW.
    if HW >= 128:
        tile_hw = min(int(max_tile_hw), (HW // 128) * 128)
        tile_hw = max(128, (tile_hw // 128) * 128)
    else:
        tile_hw = HW
    tile_b = B if B <= 8 else 8  # keeps the sublane constraint satisfied

    n_b = pl.cdiv(B, tile_b)
    n_hw = pl.cdiv(HW, tile_hw)
    needs_mask = (HW % tile_hw) != 0

    # --- VMEM budget (double-buffered x block + resident params + out) ------
    itemsize = jnp.dtype(x3.dtype).itemsize
    x_block_bytes = tile_b * C * tile_hw * itemsize
    param_bytes = (w1.size + b1.size + w2.size + b2.size) * 4
    out_block_bytes = tile_b * K * 4
    acc_bytes = tile_b * C * 4
    needed = 2 * x_block_bytes + 2 * param_bytes + 2 * out_block_bytes + acc_bytes
    # Give 2x headroom, floor at 4 MiB, cap at 64 MiB (safe on v7x's VMEM).
    vmem_limit = int(min(64 << 20, max(2 * needed + (1 << 20), 4 << 20)))

    cost = pl.CostEstimate(
        flops=B * C * HW + 2 * B * C * H1 + 2 * B * H1 * K,
        transcendentals=B * K,
        bytes_accessed=x3.size * itemsize + param_bytes + B * K * 4,
    )

    kernel = functools.partial(
        _attention_kernel,
        hw_total=HW,
        tile_hw=tile_hw,
        needs_mask=needs_mask,
        inv_temp=1.0 / float(temperature),
    )

    grid_spec = pltpu.PrefetchScalarGridSpec(
        num_scalar_prefetch=0,
        grid=(n_b, n_hw),  # batch tiles leading (parallel), HW reduction last
        in_specs=[
            # Streamed activation: one (tile_b, C, tile_hw) block per step.
            pl.BlockSpec((tile_b, C, tile_hw), lambda b, hw: (b, 0, hw)),
            # Params: constant index_map -> DMA'd once, resident in VMEM.
            pl.BlockSpec((C, H1), lambda b, hw: (0, 0)),
            pl.BlockSpec((1, H1), lambda b, hw: (0, 0)),
            pl.BlockSpec((H1, K), lambda b, hw: (0, 0)),
            pl.BlockSpec((1, K), lambda b, hw: (0, 0)),
        ],
        # Output block constant across the HW axis -> stays resident, written
        # only in the finalize phase.
        out_specs=pl.BlockSpec((tile_b, K), lambda b, hw: (b, 0)),
        scratch_shapes=[pltpu.VMEM((tile_b, C), jnp.float32)],
    )

    return pl.pallas_call(
        kernel,
        out_shape=jax.ShapeDtypeStruct((B, K), jnp.float32),
        grid_spec=grid_spec,
        compiler_params=pltpu.CompilerParams(
            dimension_semantics=("parallel", "arbitrary"),
            vmem_limit_bytes=vmem_limit,
        ),
        cost_estimate=cost,
    )(x3, w1, b1.reshape(1, H1), w2, b2.reshape(1, K))


def init_params(key, in_channels, kernel):
    """Parameter init matching the PyTorch module's shapes.

    PyTorch: fc1 = Linear(input, hidden), fc2 = Linear(hidden, kernel),
    hidden = max(1, input // 4). Weights stored transposed: (in, out).
    """
    hidden = max(1, in_channels // 4)
    k1, k2, k3, k4 = jax.random.split(key, 4)
    bound1 = 1.0 / jnp.sqrt(in_channels)
    bound2 = 1.0 / jnp.sqrt(hidden)
    w1 = jax.random.uniform(k1, (in_channels, hidden), jnp.float32, -bound1, bound1)
    b1 = jax.random.uniform(k2, (hidden,), jnp.float32, -bound1, bound1)
    w2 = jax.random.uniform(k3, (hidden, kernel), jnp.float32, -bound2, bound2)
    b2 = jax.random.uniform(k4, (kernel,), jnp.float32, -bound2, bound2)
    return w1, b1, w2, b2


def reference_forward(x, w1, b1, w2, b2, temperature=30.0):
    """Pure-JAX reference mirroring the PyTorch forward."""
    pooled = jnp.mean(x, axis=(2, 3))
    h = jnp.maximum(pooled @ w1 + b1, 0.0)
    logits = h @ w2 + b2
    return jax.nn.softmax(logits / temperature, axis=-1)


if __name__ == "__main__":
    key = jax.random.PRNGKey(0)
    TEMP = 30.0

    # --- case 1: module-typical small shape; tile_hw=128 exercises the
    # multi-step HW accumulation path (HW=256 -> 2 reduction steps). ---------
    kx1, kp1, kx2, kp2 = jax.random.split(key, 4)
    B, C, H, W, K = 2, 4, 16, 16, 4
    x = jax.random.normal(kx1, (B, C, H, W), dtype=jnp.float32)
    w1, b1, w2, b2 = init_params(kp1, C, K)

    out = attention_layer_forward(x, w1, b1, w2, b2, temperature=TEMP,
                                  max_tile_hw=128)
    out = jax.block_until_ready(out)
    ref = reference_forward(x, w1, b1, w2, b2, temperature=TEMP)
    assert out.shape == (B, K)
    assert jnp.allclose(out, ref, atol=1e-5, rtol=1e-5), (out, ref)

    # --- case 2: HW not a multiple of the tile -> exercises the tail-block
    # lane mask (HW=192, tile_hw=128 -> partial last block). -----------------
    B2, C2, H2, W2, K2 = 3, 8, 16, 12, 4
    x2 = jax.random.normal(kx2, (B2, C2, H2, W2), dtype=jnp.float32)
    p2 = init_params(kp2, C2, K2)

    out2 = attention_layer_forward(x2, *p2, temperature=TEMP, max_tile_hw=128)
    out2 = jax.block_until_ready(out2)
    ref2 = reference_forward(x2, *p2, temperature=TEMP)
    assert out2.shape == (B2, K2)
    assert jnp.allclose(out2, ref2, atol=1e-5, rtol=1e-5), (out2, ref2)

    print("KERNEL_OK")
</pallas_src>

<mosaic_0001>
module attributes {stable_mosaic.version = 11 : i64} {
  func.func @_attention_kernel(%arg0: i32, %arg1: i32, %arg2: memref<2x4x128xf32, #tpu.memory_space<vmem>>, %arg3: memref<4x1xf32, #tpu.memory_space<vmem>>, %arg4: memref<1x1xf32, #tpu.memory_space<vmem>>, %arg5: memref<1x4xf32, #tpu.memory_space<vmem>>, %arg6: memref<1x4xf32, #tpu.memory_space<vmem>>, %arg7: memref<2x4xf32, #tpu.memory_space<vmem>>, %arg8: memref<2x4xf32, #tpu.memory_space<vmem>>) attributes {dimension_semantics = [#tpu.dimension_semantics<parallel>, #tpu.dimension_semantics<arbitrary>], iteration_bounds = array<i64: 1, 2>, scalar_prefetch = 0 : i64, scratch_operands = 1 : i64, tpu.core_type = #tpu.core_type<tc>, window_params = [{transform_indices = @transform_0, window_bounds = array<i64: 2, 4, 128>}, {pipeline_mode = #tpu.pipeline_mode<synchronous>, transform_indices = @transform_1, window_bounds = array<i64: 4, 1>}, {pipeline_mode = #tpu.pipeline_mode<synchronous>, transform_indices = @transform_2, window_bounds = array<i64: 1, 1>}, {pipeline_mode = #tpu.pipeline_mode<synchronous>, transform_indices = @transform_3, window_bounds = array<i64: 1, 4>}, {pipeline_mode = #tpu.pipeline_mode<synchronous>, transform_indices = @transform_4, window_bounds = array<i64: 1, 4>}, {transform_indices = @transform_5, window_bounds = array<i64: 2, 4>}]} {
    %c0_i32 = arith.constant 0 : i32
    %0 = arith.cmpi eq, %arg1, %c0_i32 : i32
    %1 = arith.extui %0 : i1 to i32
    %c0_i32_0 = arith.constant 0 : i32
    %2 = arith.cmpi ne, %1, %c0_i32_0 : i32
    scf.if %2 {
      %cst_8 = arith.constant 0.000000e+00 : f32
      %11 = vector.broadcast %cst_8 : f32 to vector<2x4xf32>
      %c0_9 = arith.constant 0 : index
      %c0_10 = arith.constant 0 : index
      %12 = vector.load %arg8[%c0_9, %c0_10] : memref<2x4xf32, #tpu.memory_space<vmem>>, vector<2x4xf32>
      tpu.vector_store %arg8[%c0_9, %c0_10], %11 {strides = array<i32>} : memref<2x4xf32, #tpu.memory_space<vmem>>, vector<2x4xf32>,
    } else {
    }
    %c0 = arith.constant 0 : index
    %c0_1 = arith.constant 0 : index
    %c0_2 = arith.constant 0 : index
    %3 = vector.load %arg2[%c0, %c0_1, %c0_2] : memref<2x4x128xf32, #tpu.memory_space<vmem>>, vector<2x4x128xf32>
    %c0_3 = arith.constant 0 : index
    %c0_4 = arith.constant 0 : index
    %4 = vector.load %arg8[%c0_3, %c0_4] : memref<2x4xf32, #tpu.memory_space<vmem>>, vector<2x4xf32>
    %cst = arith.constant dense<0.000000e+00> : vector<2x4xf32>
    %5 = vector.multi_reduction <add>, %3, %cst [2] : vector<2x4x128xf32> to vector<2x4xf32>
    %6 = arith.addf %4, %5 : vector<2x4xf32>
    %c0_5 = arith.constant 0 : index
    %c0_6 = arith.constant 0 : index
    %7 = vector.load %arg8[%c0_5, %c0_6] : memref<2x4xf32, #tpu.memory_space<vmem>>, vector<2x4xf32>
    tpu.vector_store %arg8[%c0_5, %c0_6], %6 {strides = array<i32>} : memref<2x4xf32, #tpu.memory_space<vmem>>, vector<2x4xf32>,
    %c1_i32 = arith.constant 1 : i32
    %8 = arith.cmpi eq, %arg1, %c1_i32 : i32
    %9 = arith.extui %8 : i1 to i32
    %c0_i32_7 = arith.constant 0 : i32
    %10 = arith.cmpi ne, %9, %c0_i32_7 : i32
    scf.if %10 {
      %c0_8 = arith.constant 0 : index
      %c0_9 = arith.constant 0 : index
      %11 = vector.load %arg8[%c0_8, %c0_9] : memref<2x4xf32, #tpu.memory_space<vmem>>, vector<2x4xf32>
      %cst_10 = arith.constant 3.906250e-03 : f32
      %12 = vector.broadcast %cst_10 : f32 to vector<2x4xf32>
      %13 = arith.mulf %11, %12 : vector<2x4xf32>
      %c0_11 = arith.constant 0 : index
      %c0_12 = arith.constant 0 : index
      %14 = vector.load %arg3[%c0_11, %c0_12] : memref<4x1xf32, #tpu.memory_space<vmem>>, vector<4x1xf32>
      %cst_13 = arith.constant dense<0.000000e+00> : vector<2x1xf32>
      %15 = tpu.matmul %13, %14, %cst_13 {dimension_numbers = #tpu.dot_dimension_numbers<[1], [0], [0], [1], [0, 0, 1, 1], [], []>} : vector<2x4xf32>, vector<4x1xf32>, vector<2x1xf32> -> vector<2x1xf32>
      %c0_14 = arith.constant 0 : index
      %c0_15 = arith.constant 0 : index
      %16 = vector.load %arg4[%c0_14, %c0_15] : memref<1x1xf32, #tpu.memory_space<vmem>>, vector<1x1xf32>
      %17 = vector.broadcast %16 : vector<1x1xf32> to vector<2x1xf32>
      %18 = arith.addf %15, %17 : vector<2x1xf32>
      %cst_16 = arith.constant 0.000000e+00 : f32
      %19 = vector.broadcast %cst_16 : f32 to vector<2x1xf32>
      %20 = arith.maximumf %18, %19 : vector<2x1xf32>
      %c0_17 = arith.constant 0 : index
      %c0_18 = arith.constant 0 : index
      %21 = vector.load %arg5[%c0_17, %c0_18] : memref<1x4xf32, #tpu.memory_space<vmem>>, vector<1x4xf32>
      %cst_19 = arith.constant dense<0.000000e+00> : vector<2x4xf32>
      %22 = tpu.matmul %20, %21, %cst_19 {dimension_numbers = #tpu.dot_dimension_numbers<[1], [0], [0], [1], [0, 0, 1, 1], [], []>} : vector<2x1xf32>, vector<1x4xf32>, vector<2x4xf32> -> vector<2x4xf32>
      %c0_20 = arith.constant 0 : index
      %c0_21 = arith.constant 0 : index
      %23 = vector.load %arg6[%c0_20, %c0_21] : memref<1x4xf32, #tpu.memory_space<vmem>>, vector<1x4xf32>
      %24 = vector.broadcast %23 : vector<1x4xf32> to vector<2x4xf32>
      %25 = arith.addf %22, %24 : vector<2x4xf32>
      %cst_22 = arith.constant 0.0333333351 : f32
      %26 = vector.broadcast %cst_22 : f32 to vector<2x4xf32>
      %27 = arith.mulf %25, %26 : vector<2x4xf32>
      %cst_23 = arith.constant dense<0xFF800000> : vector<2xf32>
      %28 = vector.multi_reduction <maximumf>, %27, %cst_23 [1] : vector<2x4xf32> to vector<2xf32>
      %29 = vector.shape_cast %28 : vector<2xf32> to vector<2x1xf32>
      %30 = vector.broadcast %29 : vector<2x1xf32> to vector<2x4xf32>
      %31 = arith.subf %27, %30 : vector<2x4xf32>
      %32 = math.exp %31 : vector<2x4xf32>
      %cst_24 = arith.constant dense<0.000000e+00> : vector<2xf32>
      %33 = vector.multi_reduction <add>, %32, %cst_24 [1] : vector<2x4xf32> to vector<2xf32>
      %34 = vector.shape_cast %33 : vector<2xf32> to vector<2x1xf32>
      %35 = vector.broadcast %34 : vector<2x1xf32> to vector<2x4xf32>
      %36 = arith.divf %32, %35 : vector<2x4xf32>
      %c0_25 = arith.constant 0 : index
      %c0_26 = arith.constant 0 : index
      %37 = vector.load %arg7[%c0_25, %c0_26] : memref<2x4xf32, #tpu.memory_space<vmem>>, vector<2x4xf32>
      tpu.vector_store %arg7[%c0_25, %c0_26], %36 {strides = array<i32>} : memref<2x4xf32, #tpu.memory_space<vmem>>, vector<2x4xf32>,
    } else {
    }
    return
  }
  func.func @transform_0(%arg0: i32, %arg1: i32) -> (i32, i32, i32) {
    %c0_i32 = arith.constant 0 : i32
    %c0_i32_0 = arith.constant 0 : i32
    return %arg0, %c0_i32, %arg1 : i32, i32, i32
  }
  func.func @transform_1(%arg0: i32, %arg1: i32) -> (i32, i32) {
    %c0_i32 = arith.constant 0 : i32
    %c0_i32_0 = arith.constant 0 : i32
    %c0_i32_1 = arith.constant 0 : i32
    return %c0_i32, %c0_i32_0 : i32, i32
  }
  func.func @transform_2(%arg0: i32, %arg1: i32) -> (i32, i32) {
    %c0_i32 = arith.constant 0 : i32
    %c0_i32_0 = arith.constant 0 : i32
    %c0_i32_1 = arith.constant 0 : i32
    return %c0_i32, %c0_i32_0 : i32, i32
  }
  func.func @transform_3(%arg0: i32, %arg1: i32) -> (i32, i32) {
    %c0_i32 = arith.constant 0 : i32
    %c0_i32_0 = arith.constant 0 : i32
    %c0_i32_1 = arith.constant 0 : i32
    return %c0_i32, %c0_i32_0 : i32, i32
  }
  func.func @transform_4(%arg0: i32, %arg1: i32) -> (i32, i32) {
    %c0_i32 = arith.constant 0 : i32
    %c0_i32_0 = arith.constant 0 : i32
    %c0_i32_1 = arith.constant 0 : i32
    return %c0_i32, %c0_i32_0 : i32, i32
  }
  func.func @transform_5(%arg0: i32, %arg1: i32) -> (i32, i32) {
    %c0_i32 = arith.constant 0 : i32
    %c0_i32_0 = arith.constant 0 : i32
    return %arg0, %c0_i32 : i32, i32
  }
}

</mosaic_0001>

<llo_original>
// kernel: tpu_custom_call.1
$region0: #{tpu_custom_call.1}
  #allocation0 [shape = 'u32[]', space=smem, size = 0x4, offset = 0x4, fixed_abs, tag = 'smem constant byte address 0x4 - core index']
  #allocation1 [shape = 'u32[144,128]{1,0:T(1,128)}', space=vmem, size = 0x12000, scoped, tag = 'internal scratch']
  #allocation2 [shape = 'f32[2,4]{1,0:T(2,128)}', space=vmem, size = 0x400, scoped, tag = 'scratch operand']
  #allocation3 [shape = 'f32[1,1]{1,0:T(1,128)S(1)}', space=vmem, size = 0x200, scoped, tag = 'scoped memory for tpu_custom_call.1']
  %s0 = inlined_call_operand.hbm [shape: f32[2,4,256], index: 0, kind: input, shape index: {}]
  %s1 = inlined_call_operand.vmem [shape: f32[4,1], index: 1, kind: input, shape index: {}]
  %s2 = inlined_call_operand.<no memory space> [shape: f32[1,1], index: 2, kind: input, shape index: {}]
  %s3 = inlined_call_operand.vmem [shape: f32[1,4], index: 3, kind: input, shape index: {}]
  %s4 = inlined_call_operand.vmem [shape: f32[1,4], index: 4, kind: input, shape index: {}]
  %s5 = inlined_call_operand.hbm [shape: f32[2,4], index: 5, kind: output, shape index: {}]
  %s6 = sld [smem:[#allocation0]]
  $region65: #{tpu_custom_call.1} parent=0
    _
  %s8 = ssub.s32 1, %s6
  %s9 = scalar_select 0, %s8, %s6
  %v10 = vstv %s2
  %11 = vst [vmem:[#allocation3] sm:$0x1] %v10
  $region1: #{tpu_custom_call.1} parent=0
    #allocation4 [shape = 'u8[8192]{0}', space=vmem, size = 0x2000, scoped, tag = 'input window, operand 0']
    #allocation5 [shape = 's32[2]{0}', space=sflag, size = 0x8, scoped, tag = 'scoped memory for tpu_custom_call.1']
    #allocation6 [shape = 's32[2]{0}', space=sflag, size = 0x8, scoped, tag = 'scoped memory for tpu_custom_call.1']
    #allocation7 [shape = 'u8[1024]{0}', space=vmem, size = 0x400, scoped, tag = 'output window, operand 0, single buffered']
    %12 = vsyncpa [#allocation5], 0
    %s13 = scalar_lea.sflag [#allocation5], 1
    %14 = vsyncpa %s13, 0
    %15 = vsyncpa [#allocation6], 0
    loop: start=0, step=1, limit=4
    $region2: #{tpu_custom_call.1} parent=1 // loop_pre_header
      _
    $region3: #{tpu_custom_call.1} parent=1 // loop_header
      %s17 = sphi 0, %s21
      %p18 = scmp.ge.s32.totalorder %s17, 4
      %s24 = sphi 0, %s36
      %s25 = sphi 0, %s32
      %s26 = sphi 0, %s24
      %s27 = sphi 0, %s25
      %s28 = sphi 0, %s26
      %s29 = sphi 0, %s27
      %s41 = sphi 0, %s43
      %s44 = sphi 0, %s41
      %s45 = sphi 0, %s44
      %s61 = sphi 0, %s45
      %s65 = sphi 0, %s65
      %s67 = sphi 0, %s65
      %s68 = sphi 0, %s67
      %s82 = sphi 0, %s68
      %s86 = sphi 0, %s86
      %s88 = sphi 0, %s86
      %s89 = sphi 0, %s88
      %s103 = sphi 0, %s89
      %s107 = sphi 0, %s107
      %s109 = sphi 0, %s107
      %s110 = sphi 0, %s109
      %s124 = sphi 0, %s110
      %s128 = sphi 0, %s128
      %s130 = sphi 0, %s128
      %s131 = sphi 0, %s130
      %s145 = sphi 0, %s131
      %s151 = sphi 0, %s153
      %s154 = sphi 0, %s151
      %s155 = sphi 0, %s154
      %s171 = sphi 0, %s155
    $region4: #{tpu_custom_call.1} parent=1 // loop_header_branch
      %20 = sbr.rel (%p18) target = $region8
    $region5: #{tpu_custom_call.1} parent=1 // loop_body
      %s22 = ssub.s32 %s17, 1
      %s23 = ssub.s32 %s17, 2
      %s30 = sadd.s32 1, %s25
      %p31 = scmp.ge.s32.totalorder %s30, 2
      %s32 = scalar_select %p31, 0, %s30
      %s33 = sadd.s32 1, %s24
      %s34 = scalar_select %p31, %s33, %s24
      %p35 = scmp.ge.s32.totalorder %s34, 1
      %s36 = scalar_select %p35, 0, %s34
      %s37 = ssub.s32 %s24, %s36
      %s38 = ssub.s32 %s25, %s32
      %s39 = sor.u32 %s37, %s38
      %p40 = scmp.eq.s32.totalorder %s39, 0
      %s42 = sadd.s32 %s41, 1
      %s43 = scalar_select %p40, %s41, %s42
      %p46 = pneg %p40
      %p47 = scmp.eq.s32.totalorder %s17, 1
      %p48 = por %p46, %p47
      %p49 = scmp.ne.s32.totalorder %s41, %s44
      %p50 = scmp.eq.s32.totalorder %s17, 0
      %p51 = por %p49, %p50
      %p52 = scmp.ne.s32.totalorder %s41, %s44
      %p53 = scmp.eq.s32.totalorder %s22, 1
      %p54 = por %p52, %p53
      %p55 = scmp.ne.s32.totalorder %s44, %s45
      %p56 = scmp.eq.s32.totalorder %s22, 0
      %p57 = por %p55, %p56
      %p58 = scmp.ne.s32.totalorder %s44, %s45
      %p59 = scmp.eq.s32.totalorder %s23, 1
      %p60 = por %p58, %p59
      %p62 = scmp.ne.s32.totalorder %s45, %s61
      %p63 = scmp.eq.s32.totalorder %s23, 0
      %p64 = por %p62, %p63
      %s66 = sadd.s32 %s65, 1
      %p69 = scmp.eq.s32.totalorder %s17, 1
      %p70 = scmp.ne.s32.totalorder %s65, %s67
      %p71 = scmp.eq.s32.totalorder %s17, 0
      %p72 = por %p70, %p71
      %p73 = scmp.ne.s32.totalorder %s65, %s67
      %p74 = scmp.eq.s32.totalorder %s22, 1
      %p75 = por %p73, %p74
      %p76 = scmp.ne.s32.totalorder %s67, %s68
      %p77 = scmp.eq.s32.totalorder %s22, 0
      %p78 = por %p76, %p77
      %p79 = scmp.ne.s32.totalorder %s67, %s68
      %p80 = scmp.eq.s32.totalorder %s23, 1
      %p81 = por %p79, %p80
      %p83 = scmp.ne.s32.totalorder %s68, %s82
      %p84 = scmp.eq.s32.totalorder %s23, 0
      %p85 = por %p83, %p84
      %s87 = sadd.s32 %s86, 1
      %p90 = scmp.eq.s32.totalorder %s17, 1
      %p91 = scmp.ne.s32.totalorder %s86, %s88
      %p92 = scmp.eq.s32.totalorder %s17, 0
      %p93 = por %p91, %p92
      %p94 = scmp.ne.s32.totalorder %s86, %s88
      %p95 = scmp.eq.s32.totalorder %s22, 1
      %p96 = por %p94, %p95
      %p97 = scmp.ne.s32.totalorder %s88, %s89
      %p98 = scmp.eq.s32.totalorder %s22, 0
      %p99 = por %p97, %p98
      %p100 = scmp.ne.s32.totalorder %s88, %s89
      %p101 = scmp.eq.s32.totalorder %s23, 1
      %p102 = por %p100, %p101
      %p104 = scmp.ne.s32.totalorder %s89, %s103
      %p105 = scmp.eq.s32.totalorder %s23, 0
      %p106 = por %p104, %p105
      %s108 = sadd.s32 %s107, 1
      %p111 = scmp.eq.s32.totalorder %s17, 1
      %p112 = scmp.ne.s32.totalorder %s107, %s109
      %p113 = scmp.eq.s32.totalorder %s17, 0
      %p114 = por %p112, %p113
      %p115 = scmp.ne.s32.totalorder %s107, %s109
      %p116 = scmp.eq.s32.totalorder %s22, 1
      %p117 = por %p115, %p116
      %p118 = scmp.ne.s32.totalorder %s109, %s110
      %p119 = scmp.eq.s32.totalorder %s22, 0
      %p120 = por %p118, %p119
      %p121 = scmp.ne.s32.totalorder %s109, %s110
      %p122 = scmp.eq.s32.totalorder %s23, 1
      %p123 = por %p121, %p122
      %p125 = scmp.ne.s32.totalorder %s110, %s124
      %p126 = scmp.eq.s32.totalorder %s23, 0
      %p127 = por %p125, %p126
      %s129 = sadd.s32 %s128, 1
      %p132 = scmp.eq.s32.totalorder %s17, 1
      %p133 = scmp.ne.s32.totalorder %s128, %s130
      %p134 = scmp.eq.s32.totalorder %s17, 0
      %p135 = por %p133, %p134
      %p136 = scmp.ne.s32.totalorder %s128, %s130
      %p137 = scmp.eq.s32.totalorder %s22, 1
      %p138 = por %p136, %p137
      %p139 = scmp.ne.s32.totalorder %s130, %s131
      %p140 = scmp.eq.s32.totalorder %s22, 0
      %p141 = por %p139, %p140
      %p142 = scmp.ne.s32.totalorder %s130, %s131
      %p143 = scmp.eq.s32.totalorder %s23, 1
      %p144 = por %p142, %p143
      %p146 = scmp.ne.s32.totalorder %s131, %s145
      %p147 = scmp.eq.s32.totalorder %s23, 0
      %p148 = por %p146, %p147
      %s149 = ssub.s32 %s24, %s36
      %p150 = scmp.eq.s32.totalorder %s149, 0
      %s152 = sadd.s32 %s151, 1
      %s153 = scalar_select %p150, %s151, %s152
      %p156 = pneg %p150
      %p157 = scmp.eq.s32.totalorder %s17, 1
      %p158 = por %p156, %p157
      %p159 = scmp.ne.s32.totalorder %s151, %s154
      %p160 = scmp.eq.s32.totalorder %s17, 0
      %p161 = por %p159, %p160
      %p162 = scmp.ne.s32.totalorder %s151, %s154
      %p163 = scmp.eq.s32.totalorder %s22, 1
      %p164 = por %p162, %p163
      %p165 = scmp.ne.s32.totalorder %s154, %s155
      %p166 = scmp.eq.s32.totalorder %s22, 0
      %p167 = por %p165, %p166
      %p168 = scmp.ne.s32.totalorder %s154, %s155
      %p169 = scmp.eq.s32.totalorder %s23, 1
      %p170 = por %p168, %p169
      %p172 = scmp.ne.s32.totalorder %s155, %s171
      %p173 = scmp.eq.s32.totalorder %s23, 0
      %p174 = por %p172, %p173
      %p175 = scmp.le.s32.totalorder 1, %s17
      %p176 = scmp.lt.s32.totalorder %s17, 3
      %p177 = pnand %p175, %p176
      %p178 = pneg %p177
      // Predicated region
      $region9: #{tpu_custom_call.1} parent=5 // pred_check
        _
      $region10: #{tpu_custom_call.1} parent=5 // pred_check_branch
        %180 = sbr.rel (%p177) target = $region12
      $region11: #{tpu_custom_call.1} parent=5 // pred_region
        %s181 = ssub.s32 %s17, 1
        // Predicated region
        $region13: #{tpu_custom_call.1} parent=11 // pred_check
          %p182 = pneg %p78
        $region14: #{tpu_custom_call.1} parent=11 // pred_check_branch
          %184 = sbr.rel (%p182) target = $region16
        $region15: #{tpu_custom_call.1} parent=11 // pred_region
          _
        $region16: #{tpu_custom_call.1} parent=11 // pred_fallthru
          _
        // Predicated region
        $region17: #{tpu_custom_call.1} parent=11 // pred_check
          %p185 = pneg %p99
        $region18: #{tpu_custom_call.1} parent=11 // pred_check_branch
          %187 = sbr.rel (%p185) target = $region20
        $region19: #{tpu_custom_call.1} parent=11 // pred_region
          _
        $region20: #{tpu_custom_call.1} parent=11 // pred_fallthru
          _
        // Predicated region
        $region21: #{tpu_custom_call.1} parent=11 // pred_check
          %p188 = pneg %p120
        $region22: #{tpu_custom_call.1} parent=11 // pred_check_branch
          %190 = sbr.rel (%p188) target = $region24
        $region23: #{tpu_custom_call.1} parent=11 // pred_region
          _
        $region24: #{tpu_custom_call.1} parent=11 // pred_fallthru
          _
        // Predicated region
        $region25: #{tpu_custom_call.1} parent=11 // pred_check
          %p191 = pneg %p141
        $region26: #{tpu_custom_call.1} parent=11 // pred_check_branch
          %193 = sbr.rel (%p191) target = $region28
        $region27: #{tpu_custom_call.1} parent=11 // pred_region
          _
        $region28: #{tpu_custom_call.1} parent=11 // pred_fallthru
          _
      $region12: #{tpu_custom_call.1} parent=5 // pred_fallthru
        _
      %p194 = scmp.lt.s32.totalorder %s17, 2
      // Predicated region
      $region29: #{tpu_custom_call.1} parent=5 // pred_check
        %p195 = pneg %p194
      $region30: #{tpu_custom_call.1} parent=5 // pred_check_branch
        %197 = sbr.rel (%p195) target = $region32
      $region31: #{tpu_custom_call.1} parent=5 // pred_region
        // Predicated region
        $region33: #{tpu_custom_call.1} parent=31 // pred_check
          %p198 = pneg %p51
        $region34: #{tpu_custom_call.1} parent=31 // pred_check_branch
          %200 = sbr.rel (%p198) target = $region36
        $region35: #{tpu_custom_call.1} parent=31 // pred_region
          %s201 = sand.u32 %s41, 1
          %s202 = scalar_lea.sflag [#allocation5], %s201
          %s203 = sand.u32 %s41, 1
          %s204 = smul.addr %s203, 8
          %s205 = scalar_lea.vmem [#allocation4], %s204
          %s206 = smul.u32 2, %s24
          %s208 = ssub.s32 128, 128
          %209 = vsyncadd %s202, %s208
          %s210 = smul.addr %s206, 2
          %s211 = sadd.s32 %s25, %s210
          %s212 = smul.addr %s211, 64
          %s213 = scalar_lea.hbm %s0, %s212
          %s214 = sshll.u32 %s205, 4
          %s215 = int_to_ptr.vmem [resolvable:$true] %s214
          %220 = dma.hbm_to_vmem [thread:$0]  %s213, 128, %s215, %s202, 128, 64, 4
        $region36: #{tpu_custom_call.1} parent=31 // pred_fallthru
          _
      $region32: #{tpu_custom_call.1} parent=5 // pred_fallthru
        _
      %p221 = scmp.le.s32.totalorder 1, %s17
      %p222 = scmp.lt.s32.totalorder %s17, 3
      %p223 = pnand %p221, %p222
      %p224 = pneg %p223
      // Predicated region
      $region37: #{tpu_custom_call.1} parent=5 // pred_check
        _
      $region38: #{tpu_custom_call.1} parent=5 // pred_check_branch
        %226 = sbr.rel (%p223) target = $region40
      $region39: #{tpu_custom_call.1} parent=5 // pred_region
        %s227 = ssub.s32 %s17, 1
        %s228 = sand.u32 %s44, 1
        %s229 = scalar_lea.sflag [#allocation5], %s228
        %s230 = sand.u32 %s44, 1
        %s231 = smul.addr %s230, 8
        %s232 = scalar_lea.vmem [#allocation4], %s231
        // Predicated region
        $region41: #{tpu_custom_call.1} parent=39 // pred_check
          %p233 = pneg %p57
        $region42: #{tpu_custom_call.1} parent=39 // pred_check_branch
          %235 = sbr.rel (%p233) target = $region44
        $region43: #{tpu_custom_call.1} parent=39 // pred_region
          %236 = dma.done %s229, 128
        $region44: #{tpu_custom_call.1} parent=39 // pred_fallthru
          _
        %s237 = sand.u32 %s44, 1
        %s238 = scalar_lea.sflag [#allocation5], %s237
        %s239 = sand.u32 %s44, 1
        %s240 = smul.addr %s239, 8
        %s241 = scalar_lea.vmem [#allocation4], %s240
        %p242 = pneg %p57
        %p243 = pneg %p54
        %p244 = pneg %p78
        %p245 = pneg %p75
        %p246 = pneg %p99
        %p247 = pneg %p96
        %p248 = pneg %p120
        %p249 = pneg %p117
        %p250 = pneg %p141
        %p251 = pneg %p138
        %p252 = pneg %p167
        %p253 = pneg %p164
        %s254 = smul.u32 2, %s26
        %p255 = scmp.eq.s32.totalorder %s27, 0
        // Predicated region
        $region45: #{tpu_custom_call.1} parent=39 // pred_check
          %p256 = pneg %p255
        $region46: #{tpu_custom_call.1} parent=39 // pred_check_branch
          %258 = sbr.rel (%p256) target = $region48
        $region47: #{tpu_custom_call.1} parent=39 // pred_region
          %vm259 = vcmask 25600
          %260 = vst.msk [vmem:[#allocation2] sm:$0x3] %vm259, 0.0
        $region48: #{tpu_custom_call.1} parent=39 // pred_fallthru
          _
        %v261 = vld [vmem:[%s232] sm:$0xf]
        %v262 = vld [vmem:[%s232 + $0x4] sm:$0xf]
        %v263 = vld [vmem:[#allocation2] sm:$0x3]
        %vm264 = vcmask 1043456
        %v265 = vsel %vm264, %v261, 0.0
        %266 = vadd.xlane.f32.xlu0 %v265
        %v267 = vpop.xlane.xlu0 %266
        %v268 = vsel %vm264, %v262, 0.0
        %269 = vadd.xlane.f32.xlu0 %v268
        %v270 = vpop.xlane.xlu0 %269
        %v273 = vlaneseq
        %v274 = vand.u32 %v273, 127
        %v275 = vlaneseq
        %v276 = vshrl.u32 %v275, 7
        %v277 = vsub.s32 %v274, %v276
        %v278 = vrot.slane %v267, %v277
        %v279 = vlaneseq
        %v280 = vshrl.u32 %v279, 7
        %v281 = vsub.s32 %v274, %v280
        %v282 = vrot.slane %v270, %v281
        %vm283 = vcmask 1041409
        %v284 = vsel %vm283, %v282, %v278
        %v286 = vadd.f32 %v263, %v284
        %vm287 = vcmask 25600
        %288 = vst.msk [vmem:[#allocation2] sm:$0x3] %vm287, %v286
        %p289 = scmp.eq.s32.totalorder %s27, 1
        // Predicated region
        $region49: #{tpu_custom_call.1} parent=39 // pred_check
          %p290 = pneg %p289
        $region50: #{tpu_custom_call.1} parent=39 // pred_check_branch
          %292 = sbr.rel (%p290) target = $region52
        $region51: #{tpu_custom_call.1} parent=39 // pred_region
          %v293 = vld [vmem:[#allocation2] sm:$0x3]
          %v294 = vmul.f32 %v293, 0.00390625
          %v295 = vld [vmem:[%s1] sm:$0xf]
          %v296 = vld [vmem:[#allocation3] sm:$0x1]
          %v298 = vlaneseq
          %v299 = vshrl.u32 %v298, 7
          %v300 = vsub.s32 0, %v299
          %v301 = vrot.slane %v296, %v300
          %vm303 = vcmask 31744
          %v305 = vsel %vm303, %v294, 0
          %v308 = vsel %vm264, %v295, 0
          %310 = vmatprep.subr.mxu0 0.0
          %311 = vmatpush1.msra.mxu0 %v308
          %312 = vmatprep.subr.mxu0 0.0
          %313 = vmatpush1.msra.mxu0 0.0
          %314 = vmatprep.subr.mxu0 0.0
          %315 = vmatpush1.msra.mxu0 0.0
          %316 = vmatprep.subr.mxu0 0.0
          %317 = vmatpush1.msra.mxu0 0.0
          %318 = vmatprep.subr.mxu0 0.0
          %319 = vmatpush1.msra.mxu0 0.0
          %320 = vmatprep.subr.mxu0 0.0
          %321 = vmatpush1.msra.mxu0 0.0
          %322 = vmatprep.subr.mxu0 0.0
          %323 = vmatpush1.msra.mxu0 0.0
          %324 = vmatprep.subr.mxu0 0.0
          %325 = vmatpush1.msra.mxu0 0.0
          %326 = vmatprep.subr.mxu0 0.0
          %327 = vmatpush1.msra.mxu0 0.0
          %328 = vmatprep.subr.mxu0 0.0
          %329 = vmatpush1.msra.mxu0 0.0
          %330 = vmatprep.subr.mxu0 0.0
          %331 = vmatpush1.msra.mxu0 0.0
          %332 = vmatprep.subr.mxu0 0.0
          %333 = vmatpush1.msra.mxu0 0.0
          %334 = vmatprep.subr.mxu0 0.0
          %335 = vmatpush1.msra.mxu0 0.0
          %336 = vmatprep.subr.mxu0 0.0
          %337 = vmatpush1.msra.mxu0 0.0
          %338 = vmatprep.subr.mxu0 0.0
          %339 = vmatpush1.msra.mxu0 0.0
          %340 = vmatprep.subr.mxu0 0.0
          %341 = vmatpush1.msra.mxu0 0.0
          %342 = vmatprep.subr.mxu0 0.0
          %343 = vmatpush1.msra.mxu0 0.0
          %344 = vmatprep.subr.mxu0 0.0
          %345 = vmatpush1.msra.mxu0 0.0
          %346 = vmatprep.subr.mxu0 0.0
          %347 = vmatpush1.msra.mxu0 0.0
          %348 = vmatprep.subr.mxu0 0.0
          %349 = vmatpush1.msra.mxu0 0.0
          %350 = vmatprep.subr.mxu0 0.0
          %351 = vmatpush1.msra.mxu0 0.0
          %352 = vmatprep.subr.mxu0 0.0
          %353 = vmatpush1.msra.mxu0 0.0
          %354 = vmatprep.subr.mxu0 0.0
          %355 = vmatpush1.msra.mxu0 0.0
          %356 = vmatprep.subr.mxu0 0.0
          %357 = vmatpush1.msra.mxu0 0.0
          %358 = vmatprep.subr.mxu0 0.0
          %359 = vmatpush1.msra.mxu0 0.0
          %360 = vmatprep.subr.mxu0 0.0
          %361 = vmatpush1.msra.mxu0 0.0
          %362 = vmatprep.subr.mxu0 0.0
          %363 = vmatpush1.msra.mxu0 0.0
          %364 = vmatprep.subr.mxu0 0.0
          %365 = vmatpush1.msra.mxu0 0.0
          %366 = vmatprep.subr.mxu0 0.0
          %367 = vmatpush1.msra.mxu0 0.0
          %368 = vmatprep.subr.mxu0 0.0
          %369 = vmatpush1.msra.mxu0 0.0
          %370 = vmatprep.subr.mxu0 0.0
          %371 = vmatpush1.msra.mxu0 0.0
          %372 = vmatprep.subr.mxu0 0.0
          %373 = vmatpush1.msra.mxu0 0.0
          %374 = vmatprep.mubr.f32.mxu0 0.0
          %375 = vmatmul.mubr.f32.gmra.mrb[0].mxu0 %v305
          %v376 = vpop.f32.mrb[0].mxu0
          %v377 = vadd.f32 %v301, %v376
          %v378 = vpop.f32.mrb[0].mxu0
          %379 = vdwg.mxu0
          %v380 = vmax.f32 %v377, 0.0
          %v381 = vld [vmem:[%s3] sm:$0x1]
          %v382 = vld [vmem:[%s4] sm:$0x1]
          %v384 = vlaneseq
          %v385 = vshrl.u32 %v384, 7
          %v386 = vsub.s32 0, %v385
          %v387 = vrot.slane %v382, %v386
          %vm389 = vcmask 7168
          %v391 = vsel %vm389, %v380, 0
          %vm393 = vcmask 1040384
          %v395 = vsel %vm393, %v381, 0
          %397 = vmatprep.subr.mxu0 0.0
          %398 = vmatpush1.msra.mxu0 %v395
          %399 = vmatprep.subr.mxu0 0.0
          %400 = vmatpush1.msra.mxu0 0.0
          %401 = vmatprep.subr.mxu0 0.0
          %402 = vmatpush1.msra.mxu0 0.0
          %403 = vmatprep.subr.mxu0 0.0
          %404 = vmatpush1.msra.mxu0 0.0
          %405 = vmatprep.subr.mxu0 0.0
          %406 = vmatpush1.msra.mxu0 0.0
          %407 = vmatprep.subr.mxu0 0.0
          %408 = vmatpush1.msra.mxu0 0.0
          %409 = vmatprep.subr.mxu0 0.0
          %410 = vmatpush1.msra.mxu0 0.0
          %411 = vmatprep.subr.mxu0 0.0
          %412 = vmatpush1.msra.mxu0 0.0
          %413 = vmatprep.subr.mxu0 0.0
          %414 = vmatpush1.msra.mxu0 0.0
          %415 = vmatprep.subr.mxu0 0.0
          %416 = vmatpush1.msra.mxu0 0.0
          %417 = vmatprep.subr.mxu0 0.0
          %418 = vmatpush1.msra.mxu0 0.0
          %419 = vmatprep.subr.mxu0 0.0
          %420 = vmatpush1.msra.mxu0 0.0
          %421 = vmatprep.subr.mxu0 0.0
          %422 = vmatpush1.msra.mxu0 0.0
          %423 = vmatprep.subr.mxu0 0.0
          %424 = vmatpush1.msra.mxu0 0.0
          %425 = vmatprep.subr.mxu0 0.0
          %426 = vmatpush1.msra.mxu0 0.0
          %427 = vmatprep.subr.mxu0 0.0
          %428 = vmatpush1.msra.mxu0 0.0
          %429 = vmatprep.subr.mxu0 0.0
          %430 = vmatpush1.msra.mxu0 0.0
          %431 = vmatprep.subr.mxu0 0.0
          %432 = vmatpush1.msra.mxu0 0.0
          %433 = vmatprep.subr.mxu0 0.0
          %434 = vmatpush1.msra.mxu0 0.0
          %435 = vmatprep.subr.mxu0 0.0
          %436 = vmatpush1.msra.mxu0 0.0
          %437 = vmatprep.subr.mxu0 0.0
          %438 = vmatpush1.msra.mxu0 0.0
          %439 = vmatprep.subr.mxu0 0.0
          %440 = vmatpush1.msra.mxu0 0.0
          %441 = vmatprep.subr.mxu0 0.0
          %442 = vmatpush1.msra.mxu0 0.0
          %443 = vmatprep.subr.mxu0 0.0
          %444 = vmatpush1.msra.mxu0 0.0
          %445 = vmatprep.subr.mxu0 0.0
          %446 = vmatpush1.msra.mxu0 0.0
          %447 = vmatprep.subr.mxu0 0.0
          %448 = vmatpush1.msra.mxu0 0.0
          %449 = vmatprep.subr.mxu0 0.0
          %450 = vmatpush1.msra.mxu0 0.0
          %451 = vmatprep.subr.mxu0 0.0
          %452 = vmatpush1.msra.mxu0 0.0
          %453 = vmatprep.subr.mxu0 0.0
          %454 = vmatpush1.msra.mxu0 0.0
          %455 = vmatprep.subr.mxu0 0.0
          %456 = vmatpush1.msra.mxu0 0.0
          %457 = vmatprep.subr.mxu0 0.0
          %458 = vmatpush1.msra.mxu0 0.0
          %459 = vmatprep.subr.mxu0 0.0
          %460 = vmatpush1.msra.mxu0 0.0
          %461 = vmatprep.mubr.f32.mxu0 0.0
          %462 = vmatmul.mubr.f32.gmra.mrb[0].mxu0 %v391
          %v463 = vpop.f32.mrb[0].mxu0
          %v464 = vadd.f32 %v387, %v463
          %v465 = vpop.f32.mrb[0].mxu0
          %466 = vdwg.mxu0
          %v467 = vmul.f32 %v464, 0.033333335
          %v468 = vsel %vm287, %v467, -inf
          %469 = vmax.xlane.f32.xlu0 %v468
          %v470 = vpop.xlane.xlu0 %469
          %v471 = vsub.f32 %v467, %v470
          %v472 = vmul.f32 %v471, 1.442695
          %v473 = vpow.pop %v472
          %v474 = vsel %vm287, %v473, 0.0
          %475 = vadd.xlane.f32.xlu0 %v474
          %v476 = vpop.xlane.xlu0 %475
          %v477 = vrcp.pop %v476
          %v478 = vmul.f32 %v473, %v477
          %479 = vst.msk [vmem:[#allocation7] sm:$0x3] %vm287, %v478
        $region52: #{tpu_custom_call.1} parent=39 // pred_fallthru
          _
        // Predicated region
        $region53: #{tpu_custom_call.1} parent=39 // pred_check
          %p480 = pneg %p164
        $region54: #{tpu_custom_call.1} parent=39 // pred_check_branch
          %482 = sbr.rel (%p480) target = $region56
        $region55: #{tpu_custom_call.1} parent=39 // pred_region
          %s484 = ssub.s32 32, 32
          %485 = vsyncadd [#allocation6], %s484
          %s486 = smul.addr %s26, 32
          %s487 = scalar_lea.hbm %s5, %s486
          %s489 = sshll.u32 [#allocation7], 4
          %s490 = int_to_ptr.vmem [resolvable:$true] %s489
          %492 = dma.vmem_to_hbm [thread:$0]  %s490, 32, %s487, [#allocation6]
        $region56: #{tpu_custom_call.1} parent=39 // pred_fallthru
          _
        // Predicated region
        $region57: #{tpu_custom_call.1} parent=39 // pred_check
          %p493 = pneg %p164
        $region58: #{tpu_custom_call.1} parent=39 // pred_check_branch
          %495 = sbr.rel (%p493) target = $region60
        $region59: #{tpu_custom_call.1} parent=39 // pred_region
          %496 = dma.done [#allocation6], 32
        $region60: #{tpu_custom_call.1} parent=39 // pred_fallthru
          _
      $region40: #{tpu_custom_call.1} parent=5 // pred_fallthru
        _
      %p497 = scmp.le.s32.totalorder 2, %s17
      // Predicated region
      $region61: #{tpu_custom_call.1} parent=5 // pred_check
        %p498 = pneg %p497
      $region62: #{tpu_custom_call.1} parent=5 // pred_check_branch
        %500 = sbr.rel (%p498) target = $region64
      $region63: #{tpu_custom_call.1} parent=5 // pred_region
        %s501 = ssub.s32 %s17, 2
      $region64: #{tpu_custom_call.1} parent=5 // pred_fallthru
        _
    $region6: #{tpu_custom_call.1} parent=1 // loop_footer
      %s21 = sadd.s32 1, %s17
    $region7: #{tpu_custom_call.1} parent=1 // loop_footer_branch
      %16 = sbr.rel target = $region3
    $region8: #{tpu_custom_call.1} parent=1 // loop_exit
      _
    %502 = vsyncpa [#allocation5], 1
    %s503 = scalar_lea.sflag [#allocation5], 1
    %504 = vsyncpa %s503, 1
    %505 = vsyncpa [#allocation6], 1
    %s506 = scalar_lea.sflag [#allocation6], 1
    %507 = vsyncpa %s506, 1

</llo_original>
